<compile_context>
chip_gen: v7x
topology: tpu7x:2x2x1
jax: 0.10.0
libtpu: 0.0.40
codegen_flags: <defaults>
</compile_context>

<pallas_src>
import functools

import jax
import jax.numpy as jnp
from jax.experimental import pallas as pl
from jax.experimental.pallas import tpu as pltpu


# ---------------------------------------------------------------------------
# Kernel: 3 fused (folded-BN) linear layers for one batch tile.
# ---------------------------------------------------------------------------
def predictor_kernel(x_ref, w1_ref, b1_ref, w2_ref, b2_ref, w3_ref, b3_ref,
                     o_ref):
    x = x_ref[...]                                                   # (TB, F)

    # FC1 (+ folded BN0/BN1) + ReLU   (dropout == identity in eval)
    h1 = jnp.dot(x, w1_ref[...], preferred_element_type=jnp.float32) + b1_ref[...]
    h1 = jnp.maximum(h1, 0.0)

    # FC2 (+ folded BN2) + ReLU
    h2 = jnp.dot(h1, w2_ref[...], preferred_element_type=jnp.float32) + b2_ref[...]
    h2 = jnp.maximum(h2, 0.0)

    # FC3 (64 -> 1): N=1 matmul is wasteful on the MXU; do a lane reduction.
    o_ref[...] = jnp.sum(h2 * w3_ref[...], axis=-1, keepdims=True) + b3_ref[...]


# ---------------------------------------------------------------------------
# Parameter folding (done ONCE, outside the per-call jitted forward).
# ---------------------------------------------------------------------------
def fold_params(params, eps=1e-5):
    def bn_scale_shift(g, b, m, v):
        s = g / jnp.sqrt(v + eps)
        return s, b - m * s

    s0, t0 = bn_scale_shift(params["bn0_g"], params["bn0_b"],
                            params["bn0_m"], params["bn0_v"])
    s1, t1 = bn_scale_shift(params["bn1_g"], params["bn1_b"],
                            params["bn1_m"], params["bn1_v"])
    s2, t2 = bn_scale_shift(params["bn2_g"], params["bn2_b"],
                            params["bn2_m"], params["bn2_v"])

    w1 = params["w1"] * s0[:, None] * s1[None, :]            # (F, 64)
    b1 = (t0 @ params["w1"] + params["b1"]) * s1 + t1        # (64,)
    w2 = params["w2"] * s2[None, :]                          # (64, 64)
    b2 = params["b2"] * s2 + t2                              # (64,)
    w3 = params["w3"].T                                      # (1, 64) row
    b3 = params["b3"][None, :]                               # (1, 1)

    return {
        "w1": w1.astype(jnp.float32),
        "b1": b1[None, :].astype(jnp.float32),
        "w2": w2.astype(jnp.float32),
        "b2": b2[None, :].astype(jnp.float32),
        "w3": w3.astype(jnp.float32),
        "b3": b3.astype(jnp.float32),
    }


def _round_up(n, m):
    return ((n + m - 1) // m) * m


# ---------------------------------------------------------------------------
# Forward wrapper: batch-tiled pallas_call.
# ---------------------------------------------------------------------------
@jax.jit
def predictor_forward(x, folded):
    """x: (B, F) float32.  folded: output of fold_params(...)."""
    B, F = x.shape
    H = folded["w1"].shape[1]                                # 64

    # Batch tile: >= 512 rows when possible (per-step overhead), multiple of 8.
    TILE_B = min(1024, _round_up(B, 8))
    B_pad = _round_up(B, TILE_B)
    if B_pad != B:
        x = jnp.pad(x, ((0, B_pad - B), (0, 0)))
    grid = (B_pad // TILE_B,)

    const = lambda i: (0, 0)  # weights/biases stay VMEM-resident across the grid

    weight_bytes = 4 * (F * H + H + H * H + H + H + 1)
    cost = pl.CostEstimate(
        flops=2 * B_pad * (F * H + H * H + H),
        transcendentals=0,
        bytes_accessed=B_pad * F * 4 + B_pad * 4 + weight_bytes,
    )

    out = pl.pallas_call(
        predictor_kernel,
        out_shape=jax.ShapeDtypeStruct((B_pad, 1), jnp.float32),
        grid=grid,
        in_specs=[
            pl.BlockSpec((TILE_B, F), lambda i: (i, 0)),     # x (streamed)
            pl.BlockSpec((F, H), const),                     # w1
            pl.BlockSpec((1, H), const),                     # b1
            pl.BlockSpec((H, H), const),                     # w2
            pl.BlockSpec((1, H), const),                     # b2
            pl.BlockSpec((1, H), const),                     # w3 (row)
            pl.BlockSpec((1, 1), const),                     # b3
        ],
        out_specs=pl.BlockSpec((TILE_B, 1), lambda i: (i, 0)),
        compiler_params=pltpu.CompilerParams(
            dimension_semantics=("parallel",),               # megacore on v7x
            vmem_limit_bytes=32 << 20,                       # safe on 64 MiB v7x
        ),
        cost_estimate=cost,
    )(x, folded["w1"], folded["b1"], folded["w2"], folded["b2"],
      folded["w3"], folded["b3"])

    return out[:B]


# ---------------------------------------------------------------------------
# Parameter init (mirrors Predictor.__init__/_init_weights, eval mode).
# ---------------------------------------------------------------------------
def init_params(key, num_shared_feature, h1=64, h2=64):
    ks = jax.random.split(key, 12)

    def xavier(k, fan_in, fan_out):
        limit = jnp.sqrt(6.0 / (fan_in + fan_out))
        return jax.random.uniform(k, (fan_in, fan_out), jnp.float32, -limit, limit)

    params = {
        # BatchNorm1d(num_shared_feature)
        "bn0_g": 1.0 + 0.05 * jax.random.normal(ks[0], (num_shared_feature,), jnp.float32),
        "bn0_b": 0.05 * jax.random.normal(ks[1], (num_shared_feature,), jnp.float32),
        "bn0_m": 0.1 * jax.random.normal(ks[2], (num_shared_feature,), jnp.float32),
        "bn0_v": jnp.abs(1.0 + 0.1 * jax.random.normal(ks[3], (num_shared_feature,), jnp.float32)),
        # Linear(F, 64)
        "w1": xavier(ks[4], num_shared_feature, h1),
        "b1": 1e-6 * jax.random.normal(ks[5], (h1,), jnp.float32),
        # BatchNorm1d(64)
        "bn1_g": jnp.ones((h1,), jnp.float32),
        "bn1_b": jnp.zeros((h1,), jnp.float32),
        "bn1_m": 0.1 * jax.random.normal(ks[6], (h1,), jnp.float32),
        "bn1_v": jnp.abs(1.0 + 0.1 * jax.random.normal(ks[7], (h1,), jnp.float32)),
        # Linear(64, 64)
        "w2": xavier(ks[8], h1, h2),
        "b2": 1e-6 * jax.random.normal(ks[9], (h2,), jnp.float32),
        # BatchNorm1d(64)
        "bn2_g": jnp.ones((h2,), jnp.float32),
        "bn2_b": jnp.zeros((h2,), jnp.float32),
        "bn2_m": 0.1 * jax.random.normal(ks[10], (h2,), jnp.float32),
        "bn2_v": jnp.abs(1.0 + 0.1 * jax.random.normal(ks[11], (h2,), jnp.float32)),
        # Linear(64, 1)
        "w3": xavier(jax.random.fold_in(key, 99), h2, 1),
        "b3": 1e-6 * jax.random.normal(jax.random.fold_in(key, 100), (1,), jnp.float32),
    }
    return params


def reference_forward(x, params):
    """Pure-JAX reference mirroring the PyTorch eval-mode forward."""
    eps = 1e-5

    def bn(v, g, b, m, var):
        return (v - m) / jnp.sqrt(var + eps) * g + b

    h = bn(x, params["bn0_g"], params["bn0_b"], params["bn0_m"], params["bn0_v"])
    h = h @ params["w1"] + params["b1"]
    h = bn(h, params["bn1_g"], params["bn1_b"], params["bn1_m"], params["bn1_v"])
    h = jnp.maximum(h, 0.0)                      # dropout == identity in eval
    h = h @ params["w2"] + params["b2"]
    h = bn(h, params["bn2_g"], params["bn2_b"], params["bn2_m"], params["bn2_v"])
    h = jnp.maximum(h, 0.0)
    return h @ params["w3"] + params["b3"]


if __name__ == "__main__":
    key = jax.random.PRNGKey(0)
    num_shared_feature = 32
    batch = 8

    kx, kp = jax.random.split(key)
    x = jax.random.normal(kx, (batch, num_shared_feature), jnp.float32)
    params = init_params(kp, num_shared_feature)

    folded = jax.tree_util.tree_map(jax.block_until_ready, fold_params(params))

    out = predictor_forward(x, folded)
    jax.block_until_ready(out)

    ref = reference_forward(x, params)
    assert out.shape == (batch, 1)
    assert jnp.allclose(out, ref, atol=1e-4, rtol=1e-4)

    # Also exercise a batch that is not a multiple of the tile (tail padding path).
    x_big = jax.random.normal(jax.random.fold_in(key, 7), (1500, num_shared_feature), jnp.float32)
    out_big = predictor_forward(x_big, folded)
    jax.block_until_ready(out_big)
    ref_big = reference_forward(x_big, params)
    assert out_big.shape == (1500, 1)
    assert jnp.allclose(out_big, ref_big, atol=1e-4, rtol=1e-4)

    print("KERNEL_OK")
</pallas_src>

<mosaic_0001>
module attributes {stable_mosaic.version = 11 : i64} {
  func.func @predictor_kernel(%arg0: i32, %arg1: memref<8x32xf32, #tpu.memory_space<vmem>>, %arg2: memref<32x64xf32, #tpu.memory_space<vmem>>, %arg3: memref<1x64xf32, #tpu.memory_space<vmem>>, %arg4: memref<64x64xf32, #tpu.memory_space<vmem>>, %arg5: memref<1x64xf32, #tpu.memory_space<vmem>>, %arg6: memref<1x64xf32, #tpu.memory_space<vmem>>, %arg7: memref<1x1xf32, #tpu.memory_space<vmem>>, %arg8: memref<8x1xf32, #tpu.memory_space<vmem>>) attributes {dimension_semantics = [#tpu.dimension_semantics<parallel>], iteration_bounds = array<i64: 1>, scalar_prefetch = 0 : i64, scratch_operands = 0 : i64, tpu.core_type = #tpu.core_type<tc>, window_params = [{transform_indices = @transform_0, window_bounds = array<i64: 8, 32>}, {pipeline_mode = #tpu.pipeline_mode<synchronous>, transform_indices = @transform_1, window_bounds = array<i64: 32, 64>}, {pipeline_mode = #tpu.pipeline_mode<synchronous>, transform_indices = @transform_2, window_bounds = array<i64: 1, 64>}, {pipeline_mode = #tpu.pipeline_mode<synchronous>, transform_indices = @transform_3, window_bounds = array<i64: 64, 64>}, {pipeline_mode = #tpu.pipeline_mode<synchronous>, transform_indices = @transform_4, window_bounds = array<i64: 1, 64>}, {pipeline_mode = #tpu.pipeline_mode<synchronous>, transform_indices = @transform_5, window_bounds = array<i64: 1, 64>}, {pipeline_mode = #tpu.pipeline_mode<synchronous>, transform_indices = @transform_6, window_bounds = array<i64: 1, 1>}, {transform_indices = @transform_7, window_bounds = array<i64: 8, 1>}]} {
    %c0 = arith.constant 0 : index
    %c0_0 = arith.constant 0 : index
    %0 = vector.load %arg1[%c0, %c0_0] : memref<8x32xf32, #tpu.memory_space<vmem>>, vector<8x32xf32>
    %c0_1 = arith.constant 0 : index
    %c0_2 = arith.constant 0 : index
    %1 = vector.load %arg2[%c0_1, %c0_2] : memref<32x64xf32, #tpu.memory_space<vmem>>, vector<32x64xf32>
    %cst = arith.constant dense<0.000000e+00> : vector<8x64xf32>
    %2 = tpu.matmul %0, %1, %cst {dimension_numbers = #tpu.dot_dimension_numbers<[1], [0], [0], [1], [0, 0, 1, 1], [], []>} : vector<8x32xf32>, vector<32x64xf32>, vector<8x64xf32> -> vector<8x64xf32>
    %c0_3 = arith.constant 0 : index
    %c0_4 = arith.constant 0 : index
    %3 = vector.load %arg3[%c0_3, %c0_4] : memref<1x64xf32, #tpu.memory_space<vmem>>, vector<1x64xf32>
    %4 = vector.broadcast %3 : vector<1x64xf32> to vector<8x64xf32>
    %5 = arith.addf %2, %4 : vector<8x64xf32>
    %cst_5 = arith.constant 0.000000e+00 : f32
    %6 = vector.broadcast %cst_5 : f32 to vector<8x64xf32>
    %7 = arith.maximumf %5, %6 : vector<8x64xf32>
    %c0_6 = arith.constant 0 : index
    %c0_7 = arith.constant 0 : index
    %8 = vector.load %arg4[%c0_6, %c0_7] : memref<64x64xf32, #tpu.memory_space<vmem>>, vector<64x64xf32>
    %cst_8 = arith.constant dense<0.000000e+00> : vector<8x64xf32>
    %9 = tpu.matmul %7, %8, %cst_8 {dimension_numbers = #tpu.dot_dimension_numbers<[1], [0], [0], [1], [0, 0, 1, 1], [], []>} : vector<8x64xf32>, vector<64x64xf32>, vector<8x64xf32> -> vector<8x64xf32>
    %c0_9 = arith.constant 0 : index
    %c0_10 = arith.constant 0 : index
    %10 = vector.load %arg5[%c0_9, %c0_10] : memref<1x64xf32, #tpu.memory_space<vmem>>, vector<1x64xf32>
    %11 = vector.broadcast %10 : vector<1x64xf32> to vector<8x64xf32>
    %12 = arith.addf %9, %11 : vector<8x64xf32>
    %cst_11 = arith.constant 0.000000e+00 : f32
    %13 = vector.broadcast %cst_11 : f32 to vector<8x64xf32>
    %14 = arith.maximumf %12, %13 : vector<8x64xf32>
    %c0_12 = arith.constant 0 : index
    %c0_13 = arith.constant 0 : index
    %15 = vector.load %arg6[%c0_12, %c0_13] : memref<1x64xf32, #tpu.memory_space<vmem>>, vector<1x64xf32>
    %16 = vector.broadcast %15 : vector<1x64xf32> to vector<8x64xf32>
    %17 = arith.mulf %14, %16 : vector<8x64xf32>
    %cst_14 = arith.constant dense<0.000000e+00> : vector<8xf32>
    %18 = vector.multi_reduction <add>, %17, %cst_14 [1] : vector<8x64xf32> to vector<8xf32>
    %19 = vector.shape_cast %18 : vector<8xf32> to vector<8x1xf32>
    %c0_15 = arith.constant 0 : index
    %c0_16 = arith.constant 0 : index
    %20 = vector.load %arg7[%c0_15, %c0_16] : memref<1x1xf32, #tpu.memory_space<vmem>>, vector<1x1xf32>
    %21 = vector.broadcast %20 : vector<1x1xf32> to vector<8x1xf32>
    %22 = arith.addf %19, %21 : vector<8x1xf32>
    %c0_17 = arith.constant 0 : index
    %c0_18 = arith.constant 0 : index
    %23 = vector.load %arg8[%c0_17, %c0_18] : memref<8x1xf32, #tpu.memory_space<vmem>>, vector<8x1xf32>
    tpu.vector_store %arg8[%c0_17, %c0_18], %22 {strides = array<i32>} : memref<8x1xf32, #tpu.memory_space<vmem>>, vector<8x1xf32>,
    return
  }
  func.func @transform_0(%arg0: i32) -> (i32, i32) {
    %c0_i32 = arith.constant 0 : i32
    %c0_i32_0 = arith.constant 0 : i32
    return %arg0, %c0_i32 : i32, i32
  }
  func.func @transform_1(%arg0: i32) -> (i32, i32) {
    %c0_i32 = arith.constant 0 : i32
    %c0_i32_0 = arith.constant 0 : i32
    %c0_i32_1 = arith.constant 0 : i32
    return %c0_i32, %c0_i32_0 : i32, i32
  }
  func.func @transform_2(%arg0: i32) -> (i32, i32) {
    %c0_i32 = arith.constant 0 : i32
    %c0_i32_0 = arith.constant 0 : i32
    %c0_i32_1 = arith.constant 0 : i32
    return %c0_i32, %c0_i32_0 : i32, i32
  }
  func.func @transform_3(%arg0: i32) -> (i32, i32) {
    %c0_i32 = arith.constant 0 : i32
    %c0_i32_0 = arith.constant 0 : i32
    %c0_i32_1 = arith.constant 0 : i32
    return %c0_i32, %c0_i32_0 : i32, i32
  }
  func.func @transform_4(%arg0: i32) -> (i32, i32) {
    %c0_i32 = arith.constant 0 : i32
    %c0_i32_0 = arith.constant 0 : i32
    %c0_i32_1 = arith.constant 0 : i32
    return %c0_i32, %c0_i32_0 : i32, i32
  }
  func.func @transform_5(%arg0: i32) -> (i32, i32) {
    %c0_i32 = arith.constant 0 : i32
    %c0_i32_0 = arith.constant 0 : i32
    %c0_i32_1 = arith.constant 0 : i32
    return %c0_i32, %c0_i32_0 : i32, i32
  }
  func.func @transform_6(%arg0: i32) -> (i32, i32) {
    %c0_i32 = arith.constant 0 : i32
    %c0_i32_0 = arith.constant 0 : i32
    %c0_i32_1 = arith.constant 0 : i32
    return %c0_i32, %c0_i32_0 : i32, i32
  }
  func.func @transform_7(%arg0: i32) -> (i32, i32) {
    %c0_i32 = arith.constant 0 : i32
    %c0_i32_0 = arith.constant 0 : i32
    return %arg0, %c0_i32 : i32, i32
  }
}

</mosaic_0001>

<llo_original>
// kernel: predictor_forward.1
$region0: #{predictor_forward.1}
  #allocation0 [shape = 'u32[]', space=smem, size = 0x4, offset = 0x4, fixed_abs, tag = 'smem constant byte address 0x4 - core index']
  #allocation1 [shape = 'u32[144,128]{1,0:T(1,128)}', space=vmem, size = 0x12000, scoped, tag = 'internal scratch']
  #allocation2 [shape = 'f32[1,1]{1,0:T(1,128)S(1)}', space=vmem, size = 0x200, scoped, tag = 'scoped memory for predictor_forward.1']
  %s0 = inlined_call_operand.hbm [shape: f32[8,32], index: 0, kind: input, shape index: {}]
  %s1 = inlined_call_operand.hbm [shape: f32[32,64], index: 1, kind: input, shape index: {}]
  %s2 = inlined_call_operand.vmem [shape: f32[1,64], index: 2, kind: input, shape index: {}]
  %s3 = inlined_call_operand.hbm [shape: f32[64,64], index: 3, kind: input, shape index: {}]
  %s4 = inlined_call_operand.vmem [shape: f32[1,64], index: 4, kind: input, shape index: {}]
  %s5 = inlined_call_operand.vmem [shape: f32[1,64], index: 5, kind: input, shape index: {}]
  %s6 = inlined_call_operand.<no memory space> [shape: f32[1,1], index: 6, kind: input, shape index: {}]
  %s7 = inlined_call_operand.vmem [shape: f32[8,1], index: 7, kind: output, shape index: {}]
  %s8 = sld [smem:[#allocation0]]
  $region50: #{predictor_forward.1} parent=0
    _
  %s10 = ssub.s32 1, %s8
  %s11 = scalar_select 0, %s10, %s8
  %v12 = vstv %s6
  %13 = vst [vmem:[#allocation2] sm:$0x1] %v12
  $region1: #{predictor_forward.1} parent=0
    #allocation3 [shape = 'u8[4096]{0}', space=vmem, size = 0x1000, scoped, tag = 'input window, operand 0, single buffered']
    #allocation4 [shape = 's32[1]{0}', space=sflag, size = 0x4, scoped, tag = 'scoped memory for predictor_forward.1']
    #allocation5 [shape = 'u8[16384]{0}', space=vmem, size = 0x4000, scoped, tag = 'input window, operand 1, single buffered']
    #allocation6 [shape = 's32[1]{0}', space=sflag, size = 0x4, scoped, tag = 'scoped memory for predictor_forward.1']
    #allocation7 [shape = 'u8[32768]{0}', space=vmem, size = 0x8000, scoped, tag = 'input window, operand 3, single buffered']
    %14 = vsyncpa [#allocation4], 0
    %15 = vsyncpa [#allocation6], 0
    // Predicated region
    $region2: #{predictor_forward.1} parent=1 // pred_check
      _
    $region3: #{predictor_forward.1} parent=1 // pred_check_branch
      %17 = sbr.rel (0) target = $region5
    $region4: #{predictor_forward.1} parent=1 // pred_region
      %s19 = ssub.s32 128, 128
      %20 = vsyncadd [#allocation4], %s19
      %s22 = sshll.u32 [#allocation3], 4
      %s23 = int_to_ptr.vmem [resolvable:$true] %s22
      %25 = dma.hbm_to_vmem [thread:$0]  %s0, 128, %s23, [#allocation4]
    $region5: #{predictor_forward.1} parent=1 // pred_fallthru
      _
    // Predicated region
    $region6: #{predictor_forward.1} parent=1 // pred_check
      _
    $region7: #{predictor_forward.1} parent=1 // pred_check_branch
      %27 = sbr.rel (0) target = $region9
    $region8: #{predictor_forward.1} parent=1 // pred_region
      %s29 = ssub.s32 512, 512
      %30 = vsyncadd [#allocation6], %s29
      %s31 = sshll.u32 [#allocation5], 4
      %s32 = int_to_ptr.vmem [resolvable:$true] %s31
      %37 = dma.hbm_to_vmem [thread:$0]  %s1, 512, %s32, [#allocation6], 128, 128, 8
    $region9: #{predictor_forward.1} parent=1 // pred_fallthru
      _
    // Predicated region
    $region10: #{predictor_forward.1} parent=1 // pred_check
      _
    $region11: #{predictor_forward.1} parent=1 // pred_check_branch
      %39 = sbr.rel (0) target = $region13
    $region12: #{predictor_forward.1} parent=1 // pred_region
      _
    $region13: #{predictor_forward.1} parent=1 // pred_fallthru
      _
    // Predicated region
    $region14: #{predictor_forward.1} parent=1 // pred_check
      _
    $region15: #{predictor_forward.1} parent=1 // pred_check_branch
      %41 = sbr.rel (0) target = $region17
    $region16: #{predictor_forward.1} parent=1 // pred_region
      %s43 = ssub.s32 1024, 1024
      %44 = vsyncadd [#allocation6], %s43
      %s45 = sshll.u32 [#allocation7], 4
      %s46 = int_to_ptr.vmem [resolvable:$true] %s45
      %51 = dma.hbm_to_vmem [thread:$0]  %s3, 1024, %s46, [#allocation6], 128, 128, 8
    $region17: #{predictor_forward.1} parent=1 // pred_fallthru
      _
    // Predicated region
    $region18: #{predictor_forward.1} parent=1 // pred_check
      _
    $region19: #{predictor_forward.1} parent=1 // pred_check_branch
      %53 = sbr.rel (0) target = $region21
    $region20: #{predictor_forward.1} parent=1 // pred_region
      _
    $region21: #{predictor_forward.1} parent=1 // pred_fallthru
      _
    // Predicated region
    $region22: #{predictor_forward.1} parent=1 // pred_check
      _
    $region23: #{predictor_forward.1} parent=1 // pred_check_branch
      %55 = sbr.rel (0) target = $region25
    $region24: #{predictor_forward.1} parent=1 // pred_region
      _
    $region25: #{predictor_forward.1} parent=1 // pred_fallthru
      _
    // Predicated region
    $region26: #{predictor_forward.1} parent=1 // pred_check
      _
    $region27: #{predictor_forward.1} parent=1 // pred_check_branch
      %57 = sbr.rel (0) target = $region29
    $region28: #{predictor_forward.1} parent=1 // pred_region
      _
    $region29: #{predictor_forward.1} parent=1 // pred_fallthru
      _
    // Predicated region
    $region30: #{predictor_forward.1} parent=1 // pred_check
      _
    $region31: #{predictor_forward.1} parent=1 // pred_check_branch
      %59 = sbr.rel (0) target = $region33
    $region32: #{predictor_forward.1} parent=1 // pred_region
      %60 = dma.done [#allocation4], 128
    $region33: #{predictor_forward.1} parent=1 // pred_fallthru
      _
    // Predicated region
    $region34: #{predictor_forward.1} parent=1 // pred_check
      _
    $region35: #{predictor_forward.1} parent=1 // pred_check_branch
      %62 = sbr.rel (0) target = $region37
    $region36: #{predictor_forward.1} parent=1 // pred_region
      %63 = dma.done [#allocation6], 512
    $region37: #{predictor_forward.1} parent=1 // pred_fallthru
      _
    // Predicated region
    $region38: #{predictor_forward.1} parent=1 // pred_check
      _
    $region39: #{predictor_forward.1} parent=1 // pred_check_branch
      %65 = sbr.rel (0) target = $region41
    $region40: #{predictor_forward.1} parent=1 // pred_region
      %66 = dma.done [#allocation6], 1024
    $region41: #{predictor_forward.1} parent=1 // pred_fallthru
      _
    %v67 = vld [vmem:[#allocation3] sm:$0xff]
    %v68 = vld [vmem:[#allocation5] sm:$0xff]
    %v69 = vld [vmem:[#allocation5 + $0x8] sm:$0xff]
    %v70 = vld [vmem:[#allocation5 + $0x10] sm:$0xff]
    %v71 = vld [vmem:[#allocation5 + $0x18] sm:$0xff]
    %v72 = vld [vmem:[%s2] sm:$0x1]
    %v74 = vlaneseq
    %v75 = vshrl.u32 %v74, 7
    %v76 = vsub.s32 0, %v75
    %v77 = vrot.slane %v72, %v76
    %vm79 = vcmask 261120
    %v81 = vsel %vm79, %v67, 0
    %83 = vmatprep.subr.mxu0 0.0
    %84 = vmatpush1.msra.mxu0 %v68
    %85 = vmatprep.subr.mxu0 0.0
    %86 = vmatpush1.msra.mxu0 %v69
    %87 = vmatprep.subr.mxu0 0.0
    %88 = vmatpush1.msra.mxu0 %v70
    %89 = vmatprep.subr.mxu0 0.0
    %90 = vmatpush1.msra.mxu0 %v71
    %91 = vmatprep.subr.mxu0 0.0
    %92 = vmatpush1.msra.mxu0 0.0
    %93 = vmatprep.subr.mxu0 0.0
    %94 = vmatpush1.msra.mxu0 0.0
    %95 = vmatprep.subr.mxu0 0.0
    %96 = vmatpush1.msra.mxu0 0.0
    %97 = vmatprep.subr.mxu0 0.0
    %98 = vmatpush1.msra.mxu0 0.0
    %99 = vmatprep.subr.mxu0 0.0
    %100 = vmatpush1.msra.mxu0 0.0
    %101 = vmatprep.subr.mxu0 0.0
    %102 = vmatpush1.msra.mxu0 0.0
    %103 = vmatprep.subr.mxu0 0.0
    %104 = vmatpush1.msra.mxu0 0.0
    %105 = vmatprep.subr.mxu0 0.0
    %106 = vmatpush1.msra.mxu0 0.0
    %107 = vmatprep.subr.mxu0 0.0
    %108 = vmatpush1.msra.mxu0 0.0
    %109 = vmatprep.subr.mxu0 0.0
    %110 = vmatpush1.msra.mxu0 0.0
    %111 = vmatprep.subr.mxu0 0.0
    %112 = vmatpush1.msra.mxu0 0.0
    %113 = vmatprep.subr.mxu0 0.0
    %114 = vmatpush1.msra.mxu0 0.0
    %115 = vmatprep.subr.mxu0 0.0
    %116 = vmatpush1.msra.mxu0 0.0
    %117 = vmatprep.subr.mxu0 0.0
    %118 = vmatpush1.msra.mxu0 0.0
    %119 = vmatprep.subr.mxu0 0.0
    %120 = vmatpush1.msra.mxu0 0.0
    %121 = vmatprep.subr.mxu0 0.0
    %122 = vmatpush1.msra.mxu0 0.0
    %123 = vmatprep.subr.mxu0 0.0
    %124 = vmatpush1.msra.mxu0 0.0
    %125 = vmatprep.subr.mxu0 0.0
    %126 = vmatpush1.msra.mxu0 0.0
    %127 = vmatprep.subr.mxu0 0.0
    %128 = vmatpush1.msra.mxu0 0.0
    %129 = vmatprep.subr.mxu0 0.0
    %130 = vmatpush1.msra.mxu0 0.0
    %131 = vmatprep.subr.mxu0 0.0
    %132 = vmatpush1.msra.mxu0 0.0
    %133 = vmatprep.subr.mxu0 0.0
    %134 = vmatpush1.msra.mxu0 0.0
    %135 = vmatprep.subr.mxu0 0.0
    %136 = vmatpush1.msra.mxu0 0.0
    %137 = vmatprep.subr.mxu0 0.0
    %138 = vmatpush1.msra.mxu0 0.0
    %139 = vmatprep.subr.mxu0 0.0
    %140 = vmatpush1.msra.mxu0 0.0
    %141 = vmatprep.subr.mxu0 0.0
    %142 = vmatpush1.msra.mxu0 0.0
    %143 = vmatprep.subr.mxu0 0.0
    %144 = vmatpush1.msra.mxu0 0.0
    %145 = vmatprep.subr.mxu0 0.0
    %146 = vmatpush1.msra.mxu0 0.0
    %147 = vmatprep.mubr.f32.mxu0 0.0
    %148 = vmatmul.mubr.f32.gmra.mrb[0].mxu0 %v81
    %v149 = vpop.f32.mrb[0].mxu0
    %v150 = vadd.f32 %v77, %v149
    %v151 = vpop.f32.mrb[0].mxu0
    %152 = vdwg.mxu0
    %v153 = vmax.f32 %v150, 0.0
    %v154 = vld [vmem:[#allocation7] sm:$0xff]
    %v155 = vld [vmem:[#allocation7 + $0x8] sm:$0xff]
    %v156 = vld [vmem:[#allocation7 + $0x10] sm:$0xff]
    %v157 = vld [vmem:[#allocation7 + $0x18] sm:$0xff]
    %v158 = vld [vmem:[#allocation7 + $0x20] sm:$0xff]
    %v159 = vld [vmem:[#allocation7 + $0x28] sm:$0xff]
    %v160 = vld [vmem:[#allocation7 + $0x30] sm:$0xff]
    %v161 = vld [vmem:[#allocation7 + $0x38] sm:$0xff]
    %v162 = vld [vmem:[%s4] sm:$0x1]
    %v164 = vlaneseq
    %v165 = vshrl.u32 %v164, 7
    %v166 = vsub.s32 0, %v165
    %v167 = vrot.slane %v162, %v166
    %vm169 = vcmask 523264
    %v171 = vsel %vm169, %v153, 0
    %173 = vmatprep.subr.mxu0 0.0
    %174 = vmatpush1.msra.mxu0 %v154
    %175 = vmatprep.subr.mxu0 0.0
    %176 = vmatpush1.msra.mxu0 %v155
    %177 = vmatprep.subr.mxu0 0.0
    %178 = vmatpush1.msra.mxu0 %v156
    %179 = vmatprep.subr.mxu0 0.0
    %180 = vmatpush1.msra.mxu0 %v157
    %181 = vmatprep.subr.mxu0 0.0
    %182 = vmatpush1.msra.mxu0 %v158
    %183 = vmatprep.subr.mxu0 0.0
    %184 = vmatpush1.msra.mxu0 %v159
    %185 = vmatprep.subr.mxu0 0.0
    %186 = vmatpush1.msra.mxu0 %v160
    %187 = vmatprep.subr.mxu0 0.0
    %188 = vmatpush1.msra.mxu0 %v161
    %189 = vmatprep.subr.mxu0 0.0
    %190 = vmatpush1.msra.mxu0 0.0
    %191 = vmatprep.subr.mxu0 0.0
    %192 = vmatpush1.msra.mxu0 0.0
    %193 = vmatprep.subr.mxu0 0.0
    %194 = vmatpush1.msra.mxu0 0.0
    %195 = vmatprep.subr.mxu0 0.0
    %196 = vmatpush1.msra.mxu0 0.0
    %197 = vmatprep.subr.mxu0 0.0
    %198 = vmatpush1.msra.mxu0 0.0
    %199 = vmatprep.subr.mxu0 0.0
    %200 = vmatpush1.msra.mxu0 0.0
    %201 = vmatprep.subr.mxu0 0.0
    %202 = vmatpush1.msra.mxu0 0.0
    %203 = vmatprep.subr.mxu0 0.0
    %204 = vmatpush1.msra.mxu0 0.0
    %205 = vmatprep.subr.mxu0 0.0
    %206 = vmatpush1.msra.mxu0 0.0
    %207 = vmatprep.subr.mxu0 0.0
    %208 = vmatpush1.msra.mxu0 0.0
    %209 = vmatprep.subr.mxu0 0.0
    %210 = vmatpush1.msra.mxu0 0.0
    %211 = vmatprep.subr.mxu0 0.0
    %212 = vmatpush1.msra.mxu0 0.0
    %213 = vmatprep.subr.mxu0 0.0
    %214 = vmatpush1.msra.mxu0 0.0
    %215 = vmatprep.subr.mxu0 0.0
    %216 = vmatpush1.msra.mxu0 0.0
    %217 = vmatprep.subr.mxu0 0.0
    %218 = vmatpush1.msra.mxu0 0.0
    %219 = vmatprep.subr.mxu0 0.0
    %220 = vmatpush1.msra.mxu0 0.0
    %221 = vmatprep.subr.mxu0 0.0
    %222 = vmatpush1.msra.mxu0 0.0
    %223 = vmatprep.subr.mxu0 0.0
    %224 = vmatpush1.msra.mxu0 0.0
    %225 = vmatprep.subr.mxu0 0.0
    %226 = vmatpush1.msra.mxu0 0.0
    %227 = vmatprep.subr.mxu0 0.0
    %228 = vmatpush1.msra.mxu0 0.0
    %229 = vmatprep.subr.mxu0 0.0
    %230 = vmatpush1.msra.mxu0 0.0
    %231 = vmatprep.subr.mxu0 0.0
    %232 = vmatpush1.msra.mxu0 0.0
    %233 = vmatprep.subr.mxu0 0.0
    %234 = vmatpush1.msra.mxu0 0.0
    %235 = vmatprep.subr.mxu0 0.0
    %236 = vmatpush1.msra.mxu0 0.0
    %237 = vmatprep.mubr.f32.mxu0 0.0
    %238 = vmatmul.mubr.f32.gmra.mrb[0].mxu0 %v171
    %v239 = vpop.f32.mrb[0].mxu0
    %v240 = vadd.f32 %v167, %v239
    %v241 = vpop.f32.mrb[0].mxu0
    %242 = vdwg.mxu0
    %v243 = vmax.f32 %v240, 0.0
    %v244 = vld [vmem:[%s5] sm:$0x1]
    %v246 = vlaneseq
    %v247 = vshrl.u32 %v246, 7
    %v248 = vsub.s32 0, %v247
    %v249 = vrot.slane %v244, %v248
    %v251 = vmul.f32 %v243, %v249
    %v252 = vsel %vm169, %v251, 0.0
    %253 = vadd.xlane.f32.xlu0 %v252
    %v254 = vpop.xlane.xlu0 %253
    %v255 = vld [vmem:[#allocation2] sm:$0x1]
    %v257 = vlaneseq
    %v258 = vshrl.u32 %v257, 7
    %v259 = vsub.s32 0, %v258
    %v260 = vrot.slane %v255, %v259
    %v262 = vadd.f32 %v254, %v260
    %vm263 = vcmask 7168
    %264 = vst.msk [vmem:[%s7] sm:$0xff] %vm263, %v262
    // Predicated region
    $region42: #{predictor_forward.1} parent=1 // pred_check
      _
    $region43: #{predictor_forward.1} parent=1 // pred_check_branch
      %266 = sbr.rel (0) target = $region45
    $region44: #{predictor_forward.1} parent=1 // pred_region
      _
    $region45: #{predictor_forward.1} parent=1 // pred_fallthru
      _
    // Predicated region
    $region46: #{predictor_forward.1} parent=1 // pred_check
      _
    $region47: #{predictor_forward.1} parent=1 // pred_check_branch
      %268 = sbr.rel (0) target = $region49
    $region48: #{predictor_forward.1} parent=1 // pred_region
      _
    $region49: #{predictor_forward.1} parent=1 // pred_fallthru
      _
    %269 = vsyncpa [#allocation4], 1
    %270 = vsyncpa [#allocation6], 1

</llo_original>
